<compile_context>
chip_gen: v5e
topology: v5e:2x2
jax: 0.10.0
libtpu: 0.0.40
codegen_flags: <defaults>
</compile_context>

<pallas_src>
import jax
import jax.numpy as jnp
from jax.experimental import pallas as pl
from jax.experimental.pallas import tpu as pltpu


def _round_up(a, b):
    return (a + b - 1) // b * b


def _linear_nobias_kernel(x_ref, w_ref, o_ref):
    # x_ref: (TM, K)   w_ref: (K, N_pad)   o_ref: (TM, N_pad)
    # K <= 6 for TimesNet freq maps -> unrolled VPU broadcast-FMA, no MXU.
    K = w_ref.shape[0]
    x = x_ref[...].astype(jnp.float32)
    w = w_ref[...].astype(jnp.float32)
    acc = x[:, 0:1] * w[0:1, :]
    for k in range(1, K):
        acc = acc + x[:, k : k + 1] * w[k : k + 1, :]
    o_ref[...] = acc.astype(o_ref.dtype)


def prepare_weight(weight):
    """weight: [d_model, d_inp] (PyTorch nn.Linear layout) ->
    kernel layout [d_inp, N_pad] with N_pad = d_model rounded up to 128.
    Do this once (e.g. at parameter load time), not per forward call."""
    d_model, d_inp = weight.shape
    n_pad = _round_up(d_model, 128)
    w = weight.T  # [d_inp, d_model]
    if n_pad != d_model:
        w = jnp.pad(w, ((0, 0), (0, n_pad - d_model)))
    return w


def time_feature_embedding(x, w_prepared, d_model, *, tm_default=1024):
    """x: [B, L, d_inp] float32; w_prepared: [d_inp, N_pad] from prepare_weight."""
    B, L, d_inp = x.shape
    n_pad = w_prepared.shape[1]
    assert w_prepared.shape[0] == d_inp

    M = B * L
    # Row tile: big enough to pipeline well, never larger than the (padded)
    # problem.  Always a multiple of 8 sublanes.
    tm = min(tm_default, _round_up(M, 8))
    m_pad = _round_up(M, tm)

    x2d = x.reshape(M, d_inp)
    if m_pad != M:
        x2d = jnp.pad(x2d, ((0, m_pad - M), (0, 0)))  # full last tile, no masking

    grid = (m_pad // tm,)
    out = pl.pallas_call(
        _linear_nobias_kernel,
        out_shape=jax.ShapeDtypeStruct((m_pad, n_pad), x.dtype),
        grid_spec=pltpu.PrefetchScalarGridSpec(
            num_scalar_prefetch=0,
            grid=grid,
            in_specs=[
                # x: one row-tile per grid step (tm multiple of 8, K = full extent).
                pl.BlockSpec((tm, d_inp), lambda i: (i, 0)),
                # weight: tiny, resident across all grid steps.
                pl.BlockSpec((d_inp, n_pad), lambda i: (0, 0)),
            ],
            # lane-dense output tile: N_pad is a multiple of 128 -> unmasked vst.
            out_specs=pl.BlockSpec((tm, n_pad), lambda i: (i, 0)),
        ),
        compiler_params=pltpu.CompilerParams(
            # Row tiles are independent -> shard across TCs on v7x megacore.
            dimension_semantics=("parallel",)
        ),
    )(x2d, w_prepared)

    return out[:M, :d_model].reshape(B, L, d_model)


if __name__ == "__main__":
    # freq='h' -> d_inp = 4 (per freq_map); pick small d_model for the demo.
    B, L, d_inp, d_model = 2, 8, 4, 32

    key = jax.random.PRNGKey(0)
    kx, kw = jax.random.split(key)
    x = jax.random.normal(kx, (B, L, d_inp), dtype=jnp.float32)
    # Deterministic synthetic weight in PyTorch nn.Linear layout (d_model, d_inp).
    weight = jax.random.normal(kw, (d_model, d_inp), dtype=jnp.float32) * 0.1

    w_prepared = prepare_weight(weight)  # one-time transpose + lane pad
    y = time_feature_embedding(x, w_prepared, d_model)
    y = jax.block_until_ready(y)

    # Reference check against plain JAX (same semantics as torch: x @ W.T).
    y_ref = jnp.einsum("bld,md->blm", x, weight)
    assert y.shape == (B, L, d_model)
    assert jnp.allclose(y, y_ref, atol=1e-5, rtol=1e-5)

    print("KERNEL_OK")
</pallas_src>

<mosaic_0001>
module attributes {stable_mosaic.version = 11 : i64} {
  func.func @_linear_nobias_kernel(%arg0: i32, %arg1: memref<16x4xf32, #tpu.memory_space<vmem>>, %arg2: memref<4x128xf32, #tpu.memory_space<vmem>>, %arg3: memref<16x128xf32, #tpu.memory_space<vmem>>) attributes {dimension_semantics = [#tpu.dimension_semantics<parallel>], iteration_bounds = array<i64: 1>, scalar_prefetch = 0 : i64, scratch_operands = 0 : i64, tpu.core_type = #tpu.core_type<tc>, window_params = [{transform_indices = @transform_0, window_bounds = array<i64: 16, 4>}, {pipeline_mode = #tpu.pipeline_mode<synchronous>, transform_indices = @transform_1, window_bounds = array<i64: 4, 128>}, {transform_indices = @transform_2, window_bounds = array<i64: 16, 128>}]} {
    %c0 = arith.constant 0 : index
    %c0_0 = arith.constant 0 : index
    %0 = vector.load %arg1[%c0, %c0_0] : memref<16x4xf32, #tpu.memory_space<vmem>>, vector<16x4xf32>
    %c0_1 = arith.constant 0 : index
    %c0_2 = arith.constant 0 : index
    %1 = vector.load %arg2[%c0_1, %c0_2] : memref<4x128xf32, #tpu.memory_space<vmem>>, vector<4x128xf32>
    %2 = vector.extract_strided_slice %0 {offsets = [0, 0], sizes = [16, 1], strides = [1, 1]} : vector<16x4xf32> to vector<16x1xf32>
    %3 = vector.extract_strided_slice %1 {offsets = [0, 0], sizes = [1, 128], strides = [1, 1]} : vector<4x128xf32> to vector<1x128xf32>
    %4 = vector.broadcast %2 : vector<16x1xf32> to vector<16x128xf32>
    %5 = vector.broadcast %3 : vector<1x128xf32> to vector<16x128xf32>
    %6 = arith.mulf %4, %5 : vector<16x128xf32>
    %7 = vector.extract_strided_slice %0 {offsets = [0, 1], sizes = [16, 1], strides = [1, 1]} : vector<16x4xf32> to vector<16x1xf32>
    %8 = vector.extract_strided_slice %1 {offsets = [1, 0], sizes = [1, 128], strides = [1, 1]} : vector<4x128xf32> to vector<1x128xf32>
    %9 = vector.broadcast %7 : vector<16x1xf32> to vector<16x128xf32>
    %10 = vector.broadcast %8 : vector<1x128xf32> to vector<16x128xf32>
    %11 = arith.mulf %9, %10 : vector<16x128xf32>
    %12 = arith.addf %6, %11 : vector<16x128xf32>
    %13 = vector.extract_strided_slice %0 {offsets = [0, 2], sizes = [16, 1], strides = [1, 1]} : vector<16x4xf32> to vector<16x1xf32>
    %14 = vector.extract_strided_slice %1 {offsets = [2, 0], sizes = [1, 128], strides = [1, 1]} : vector<4x128xf32> to vector<1x128xf32>
    %15 = vector.broadcast %13 : vector<16x1xf32> to vector<16x128xf32>
    %16 = vector.broadcast %14 : vector<1x128xf32> to vector<16x128xf32>
    %17 = arith.mulf %15, %16 : vector<16x128xf32>
    %18 = arith.addf %12, %17 : vector<16x128xf32>
    %19 = vector.extract_strided_slice %0 {offsets = [0, 3], sizes = [16, 1], strides = [1, 1]} : vector<16x4xf32> to vector<16x1xf32>
    %20 = vector.extract_strided_slice %1 {offsets = [3, 0], sizes = [1, 128], strides = [1, 1]} : vector<4x128xf32> to vector<1x128xf32>
    %21 = vector.broadcast %19 : vector<16x1xf32> to vector<16x128xf32>
    %22 = vector.broadcast %20 : vector<1x128xf32> to vector<16x128xf32>
    %23 = arith.mulf %21, %22 : vector<16x128xf32>
    %24 = arith.addf %18, %23 : vector<16x128xf32>
    %c0_3 = arith.constant 0 : index
    %c0_4 = arith.constant 0 : index
    %25 = vector.load %arg3[%c0_3, %c0_4] : memref<16x128xf32, #tpu.memory_space<vmem>>, vector<16x128xf32>
    tpu.vector_store %arg3[%c0_3, %c0_4], %24 {strides = array<i32>} : memref<16x128xf32, #tpu.memory_space<vmem>>, vector<16x128xf32>,
    return
  }
  func.func @transform_0(%arg0: i32) -> (i32, i32) {
    %c0_i32 = arith.constant 0 : i32
    %c0_i32_0 = arith.constant 0 : i32
    return %arg0, %c0_i32 : i32, i32
  }
  func.func @transform_1(%arg0: i32) -> (i32, i32) {
    %c0_i32 = arith.constant 0 : i32
    %c0_i32_0 = arith.constant 0 : i32
    %c0_i32_1 = arith.constant 0 : i32
    return %c0_i32, %c0_i32_0 : i32, i32
  }
  func.func @transform_2(%arg0: i32) -> (i32, i32) {
    %c0_i32 = arith.constant 0 : i32
    %c0_i32_0 = arith.constant 0 : i32
    return %arg0, %c0_i32 : i32, i32
  }
}

</mosaic_0001>

<llo_original>
// kernel: tpu_custom_call.1
$region0: #{tpu_custom_call.1}
  #allocation0 [shape = 'u32[]', space=smem, size = 0x4, offset = 0x4, fixed_abs, tag = 'smem constant byte address 0x4 - core index']
  #allocation1 [shape = 'u32[72,128]{1,0:T(1,128)}', space=vmem, size = 0x9000, scoped, tag = 'internal scratch']
  %s0 = inlined_call_operand.vmem [shape: f32[16,4], index: 0, kind: input, shape index: {}]
  %s1 = inlined_call_operand.vmem [shape: f32[4,128], index: 1, kind: input, shape index: {}]
  %s2 = inlined_call_operand.hbm [shape: f32[16,128], index: 2, kind: output, shape index: {}]
  %s3 = sld [smem:[#allocation0]]
  $region18: #{tpu_custom_call.1} parent=0
    _
  %s5 = ssub.s32 1, %s3
  %s6 = scalar_select 0, %s5, %s3
  $region1: #{tpu_custom_call.1} parent=0
    #allocation2 [shape = 'u8[8192]{0}', space=vmem, size = 0x2000, scoped, tag = 'output window, operand 0, single buffered']
    #allocation3 [shape = 's32[1]{0}', space=sflag, size = 0x4, scoped, tag = 'scoped memory for tpu_custom_call.1']
    %7 = vsyncpa [#allocation3], 0
    // Predicated region
    $region2: #{tpu_custom_call.1} parent=1 // pred_check
      _
    $region3: #{tpu_custom_call.1} parent=1 // pred_check_branch
      %9 = sbr.rel (0) target = $region5
    $region4: #{tpu_custom_call.1} parent=1 // pred_region
      _
    $region5: #{tpu_custom_call.1} parent=1 // pred_fallthru
      _
    // Predicated region
    $region6: #{tpu_custom_call.1} parent=1 // pred_check
      _
    $region7: #{tpu_custom_call.1} parent=1 // pred_check_branch
      %11 = sbr.rel (0) target = $region9
    $region8: #{tpu_custom_call.1} parent=1 // pred_region
      _
    $region9: #{tpu_custom_call.1} parent=1 // pred_fallthru
      _
    %v12 = vld [vmem:[%s0] sm:$0xff]
    %v13 = vld [vmem:[%s0 + $0x8] sm:$0xff]
    %v14 = vld [vmem:[%s1] sm:$0xf]
    %16 = vset.pattern.permute.xlu0 0
    %17 = vperm.xlu0 %16, %v12
    %v18 = vpop.permute.xlu0 %17
    %21 = vset.pattern.permute.xlu0 0
    %22 = vperm.xlu0 %21, %v13
    %v23 = vpop.permute.xlu0 %22
    %v25 = vperm.slane %v14, 0
    %v26 = vmul.f32 %v18, %v25
    %v27 = vmul.f32 %v23, %v25
    %28 = vset.pattern.permute.xlu0 1
    %29 = vperm.xlu0 %28, %v12
    %v30 = vpop.permute.xlu0 %29
    %32 = vset.pattern.permute.xlu0 1
    %33 = vperm.xlu0 %32, %v13
    %v34 = vpop.permute.xlu0 %33
    %v36 = vperm.slane %v14, 1
    %v37 = vmul.f32 %v30, %v36
    %v38 = vmul.f32 %v34, %v36
    %v39 = vadd.f32 %v26, %v37
    %v40 = vadd.f32 %v27, %v38
    %41 = vset.pattern.permute.xlu0 2
    %42 = vperm.xlu0 %41, %v12
    %v43 = vpop.permute.xlu0 %42
    %45 = vset.pattern.permute.xlu0 2
    %46 = vperm.xlu0 %45, %v13
    %v47 = vpop.permute.xlu0 %46
    %v49 = vperm.slane %v14, 2
    %v50 = vmul.f32 %v43, %v49
    %v51 = vmul.f32 %v47, %v49
    %v52 = vadd.f32 %v39, %v50
    %v53 = vadd.f32 %v40, %v51
    %54 = vset.pattern.permute.xlu0 3
    %55 = vperm.xlu0 %54, %v12
    %v56 = vpop.permute.xlu0 %55
    %58 = vset.pattern.permute.xlu0 3
    %59 = vperm.xlu0 %58, %v13
    %v60 = vpop.permute.xlu0 %59
    %v62 = vperm.slane %v14, 3
    %v63 = vmul.f32 %v56, %v62
    %v64 = vmul.f32 %v60, %v62
    %v65 = vadd.f32 %v52, %v63
    %v66 = vadd.f32 %v53, %v64
    %67 = vst [vmem:[#allocation2] sm:$0xff] %v65
    %68 = vst [vmem:[#allocation2 + $0x8] sm:$0xff] %v66
    // Predicated region
    $region10: #{tpu_custom_call.1} parent=1 // pred_check
      _
    $region11: #{tpu_custom_call.1} parent=1 // pred_check_branch
      %70 = sbr.rel (0) target = $region13
    $region12: #{tpu_custom_call.1} parent=1 // pred_region
      %72 = vsyncadd [#allocation3], 0
      %s73 = sshll.u32 [#allocation2], 4
      %s74 = int_to_ptr.vmem [resolvable:$true] %s73
      %s75 = sshll.u32 %s2, 4
      %s76 = int_to_ptr.hbm [resolvable:$true] %s75
      %81 = dma.vmem_to_hbm [thread:$0]  %s74, 256, %s76, [#allocation3], 128, 128, 8
    $region13: #{tpu_custom_call.1} parent=1 // pred_fallthru
      _
    // Predicated region
    $region14: #{tpu_custom_call.1} parent=1 // pred_check
      _
    $region15: #{tpu_custom_call.1} parent=1 // pred_check_branch
      %83 = sbr.rel (0) target = $region17
    $region16: #{tpu_custom_call.1} parent=1 // pred_region
      %85 = dma.done [#allocation3], 256
    $region17: #{tpu_custom_call.1} parent=1 // pred_fallthru
      _
    %86 = vsyncpa [#allocation3], 1

</llo_original>
